<compile_context>
chip_gen: v6e
topology: v6e:2x2x1
jax: 0.10.0
libtpu: 0.0.40
codegen_flags: <defaults>
</compile_context>

<pallas_src>
import functools

import jax
import jax.numpy as jnp
from jax.experimental import pallas as pl
from jax.experimental.pallas import tpu as pltpu


def _round_up(x, m):
    return (x + m - 1) // m * m


def _mlp_kernel(x_ref, w1_ref, b1_ref, w2_ref, b2_ref, w3_ref, b3_ref, o_ref):
    """One batch-tile of the 3-layer tanh MLP.

    x_ref : (TM, Dp)    VMEM   (matmul dtype, cast once in wrapper)
    w1_ref: (Dp, Hp)    VMEM   b1_ref: (1, Hp)  f32
    w2_ref: (Hp, Hp)    VMEM   b2_ref: (1, Hp)  f32
    w3_ref: (Hp, Dp)    VMEM   b3_ref: (1, Dp)  f32
    o_ref : (TM, Dp)    VMEM   (output dtype)
    """
    # fc1 + tanh   (dropout p=0.0 -> identity)
    h = jnp.dot(x_ref[...], w1_ref[...], preferred_element_type=jnp.float32)
    h = jnp.tanh(h + b1_ref[...])

    # fc2 + tanh   (dropout p=0.0 -> identity)
    h = h.astype(w2_ref.dtype)
    h = jnp.dot(h, w2_ref[...], preferred_element_type=jnp.float32)
    h = jnp.tanh(h + b2_ref[...])

    # fc3 + tanh
    h = h.astype(w3_ref.dtype)
    h = jnp.dot(h, w3_ref[...], preferred_element_type=jnp.float32)
    h = jnp.tanh(h + b3_ref[...])

    o_ref[...] = h.astype(o_ref.dtype)


@functools.partial(jax.jit, static_argnames=("tile_m", "matmul_dtype"))
def generator_net2_forward(x, w1, b1, w2, b2, w3, b3, *,
                           tile_m=256, matmul_dtype=jnp.float32):
    """x: (B, D) -> (B, D), same dtype as x."""
    B, D = x.shape
    H = w1.shape[1]          # 2 * D
    out_dtype = x.dtype

    # ---- lane padding: feature dims to multiples of 128 (zero pad is exact) ------
    Dp = _round_up(max(D, 1), 128)
    Hp = _round_up(max(H, 1), 128)
    if Dp != D or Hp != H:
        x = jnp.pad(x, ((0, 0), (0, Dp - D)))
        w1 = jnp.pad(w1, ((0, Dp - D), (0, Hp - H)))
        b1 = jnp.pad(b1, (0, Hp - H))
        w2 = jnp.pad(w2, ((0, Hp - H), (0, Hp - H)))
        b2 = jnp.pad(b2, (0, Hp - H))
        w3 = jnp.pad(w3, ((0, Hp - H), (0, Dp - D)))
        b3 = jnp.pad(b3, (0, Dp - D))

    # ---- balanced batch tiling (static Python math) -------------------------------
    # Minimal #steps for the requested tile, then rebalance the tile so tail
    # padding is minimal; tile stays a multiple of 8 (f32 sublane).
    Bp8 = _round_up(B, 8)
    n_steps = max(1, -(-Bp8 // max(tile_m, 8)))
    tm = _round_up(-(-Bp8 // n_steps), 8)
    Bp = tm * n_steps
    if Bp != B:
        x = jnp.pad(x, ((0, Bp - B), (0, 0)))
    grid = (n_steps,)

    # ---- one-time casts in the wrapper (not per grid step) ------------------------
    mm_dt = jnp.dtype(matmul_dtype)
    xm = x.astype(mm_dt)
    w1m, w2m, w3m = w1.astype(mm_dt), w2.astype(mm_dt), w3.astype(mm_dt)
    # Biases stay f32 (added to the f32 MXU accumulator) and 2-D for TPU layout.
    b1_2d = b1.reshape(1, Hp).astype(jnp.float32)
    b2_2d = b2.reshape(1, Hp).astype(jnp.float32)
    b3_2d = b3.reshape(1, Dp).astype(jnp.float32)

    # ---- VMEM budget (weights are full-array resident; x/out double-buffered) -----
    mm_isz = mm_dt.itemsize
    out_isz = jnp.dtype(out_dtype).itemsize
    wbytes = (Dp * Hp + Hp * Hp + Hp * Dp) * mm_isz
    bbytes = (2 * Hp + Dp) * 4
    io_bytes = tm * Dp * (mm_isz + out_isz)
    interm = 3 * tm * Hp * 4
    vmem_limit = int(min(wbytes + bbytes + 2 * io_bytes + interm + (4 << 20),
                         64 * 1024 * 1024))

    cost = pl.CostEstimate(
        flops=2 * Bp * (Dp * Hp + Hp * Hp + Hp * Dp),
        transcendentals=Bp * (2 * Hp + Dp),
        bytes_accessed=Bp * Dp * (mm_isz + out_isz) + wbytes + bbytes,
    )

    out = pl.pallas_call(
        _mlp_kernel,
        out_shape=jax.ShapeDtypeStruct((Bp, Dp), out_dtype),
        grid_spec=pltpu.PrefetchScalarGridSpec(
            num_scalar_prefetch=0,
            grid=grid,
            in_specs=[
                pl.BlockSpec((tm, Dp), lambda i: (i, 0)),   # x batch tile
                pl.BlockSpec((Dp, Hp), lambda i: (0, 0)),   # w1 (resident)
                pl.BlockSpec((1, Hp), lambda i: (0, 0)),    # b1
                pl.BlockSpec((Hp, Hp), lambda i: (0, 0)),   # w2 (resident)
                pl.BlockSpec((1, Hp), lambda i: (0, 0)),    # b2
                pl.BlockSpec((Hp, Dp), lambda i: (0, 0)),   # w3 (resident)
                pl.BlockSpec((1, Dp), lambda i: (0, 0)),    # b3
            ],
            out_specs=pl.BlockSpec((tm, Dp), lambda i: (i, 0)),
        ),
        compiler_params=pltpu.CompilerParams(
            dimension_semantics=("parallel",),   # shard batch tiles across TCs (v7x)
            vmem_limit_bytes=vmem_limit,
        ),
        cost_estimate=cost,
    )(xm, w1m, b1_2d, w2m, b2_2d, w3m, b3_2d)

    # Slice off batch-tail / lane padding.
    return out[:B, :D]


def init_params(key, input_dim):
    """nn.Linear-style init (uniform +/- 1/sqrt(fan_in)); weights as (in, out)."""
    H = 2 * input_dim
    ks = jax.random.split(key, 6)

    def lin(kw, kb, fan_in, fan_out):
        bound = 1.0 / jnp.sqrt(jnp.float32(fan_in))
        w = jax.random.uniform(kw, (fan_in, fan_out), jnp.float32, -bound, bound)
        b = jax.random.uniform(kb, (fan_out,), jnp.float32, -bound, bound)
        return w, b

    w1, b1 = lin(ks[0], ks[1], input_dim, H)
    w2, b2 = lin(ks[2], ks[3], H, H)
    w3, b3 = lin(ks[4], ks[5], H, input_dim)
    return w1, b1, w2, b2, w3, b3


def reference_forward(x, w1, b1, w2, b2, w3, b3):
    h = jnp.tanh(x @ w1 + b1)
    h = jnp.tanh(h @ w2 + b2)
    h = jnp.tanh(h @ w3 + b3)
    return h


if __name__ == "__main__":
    key = jax.random.PRNGKey(0)
    k_x, k_p, k_x2, k_p2 = jax.random.split(key, 4)

    # --- main test shape: lane-aligned, whole batch in a single grid step ---------
    batch, input_dim = 16, 128
    x = jax.random.normal(k_x, (batch, input_dim), jnp.float32)
    params = init_params(k_p, input_dim)
    ref = reference_forward(x, *params)

    # f32 path (strict check)
    out_f32 = jax.block_until_ready(generator_net2_forward(x, *params))
    assert out_f32.shape == (batch, input_dim)
    assert jnp.allclose(out_f32, ref, atol=1e-5, rtol=1e-5), "f32 mismatch vs reference"

    # bf16-matmul path (f32 accumulation + f32 tanh); looser tolerance vs f32 ref.
    out_bf16 = jax.block_until_ready(
        generator_net2_forward(x, *params, matmul_dtype=jnp.bfloat16))
    assert out_bf16.shape == (batch, input_dim)
    assert float(jnp.max(jnp.abs(out_bf16 - ref))) < 1e-1, "bf16 mismatch vs reference"

    # --- ragged shape: exercises balanced multi-step grid + lane/tail padding ------
    batch2, input_dim2 = 44, 96
    x2 = jax.random.normal(k_x2, (batch2, input_dim2), jnp.float32)
    params2 = init_params(k_p2, input_dim2)
    ref2 = reference_forward(x2, *params2)
    out2 = jax.block_until_ready(generator_net2_forward(x2, *params2, tile_m=16))
    assert out2.shape == (batch2, input_dim2)
    assert jnp.allclose(out2, ref2, atol=1e-5, rtol=1e-5), "padded-path mismatch"

    print("KERNEL_OK")
</pallas_src>

<mosaic_0001>
module attributes {stable_mosaic.version = 11 : i64} {
  func.func @_mlp_kernel(%arg0: i32, %arg1: memref<16x128xf32, #tpu.memory_space<vmem>>, %arg2: memref<128x256xf32, #tpu.memory_space<vmem>>, %arg3: memref<1x256xf32, #tpu.memory_space<vmem>>, %arg4: memref<256x256xf32, #tpu.memory_space<vmem>>, %arg5: memref<1x256xf32, #tpu.memory_space<vmem>>, %arg6: memref<256x128xf32, #tpu.memory_space<vmem>>, %arg7: memref<1x128xf32, #tpu.memory_space<vmem>>, %arg8: memref<16x128xf32, #tpu.memory_space<vmem>>) attributes {dimension_semantics = [#tpu.dimension_semantics<parallel>], iteration_bounds = array<i64: 1>, scalar_prefetch = 0 : i64, scratch_operands = 0 : i64, tpu.core_type = #tpu.core_type<tc>, window_params = [{transform_indices = @transform_0, window_bounds = array<i64: 16, 128>}, {pipeline_mode = #tpu.pipeline_mode<synchronous>, transform_indices = @transform_1, window_bounds = array<i64: 128, 256>}, {pipeline_mode = #tpu.pipeline_mode<synchronous>, transform_indices = @transform_2, window_bounds = array<i64: 1, 256>}, {pipeline_mode = #tpu.pipeline_mode<synchronous>, transform_indices = @transform_3, window_bounds = array<i64: 256, 256>}, {pipeline_mode = #tpu.pipeline_mode<synchronous>, transform_indices = @transform_4, window_bounds = array<i64: 1, 256>}, {pipeline_mode = #tpu.pipeline_mode<synchronous>, transform_indices = @transform_5, window_bounds = array<i64: 256, 128>}, {pipeline_mode = #tpu.pipeline_mode<synchronous>, transform_indices = @transform_6, window_bounds = array<i64: 1, 128>}, {transform_indices = @transform_7, window_bounds = array<i64: 16, 128>}]} {
    %c0 = arith.constant 0 : index
    %c0_0 = arith.constant 0 : index
    %0 = vector.load %arg1[%c0, %c0_0] : memref<16x128xf32, #tpu.memory_space<vmem>>, vector<16x128xf32>
    %c0_1 = arith.constant 0 : index
    %c0_2 = arith.constant 0 : index
    %1 = vector.load %arg2[%c0_1, %c0_2] : memref<128x256xf32, #tpu.memory_space<vmem>>, vector<128x256xf32>
    %cst = arith.constant dense<0.000000e+00> : vector<16x256xf32>
    %2 = tpu.matmul %0, %1, %cst {dimension_numbers = #tpu.dot_dimension_numbers<[1], [0], [0], [1], [0, 0, 1, 1], [], []>} : vector<16x128xf32>, vector<128x256xf32>, vector<16x256xf32> -> vector<16x256xf32>
    %c0_3 = arith.constant 0 : index
    %c0_4 = arith.constant 0 : index
    %3 = vector.load %arg3[%c0_3, %c0_4] : memref<1x256xf32, #tpu.memory_space<vmem>>, vector<1x256xf32>
    %4 = vector.broadcast %3 : vector<1x256xf32> to vector<16x256xf32>
    %5 = arith.addf %2, %4 : vector<16x256xf32>
    %6 = math.tanh %5 : vector<16x256xf32>
    %c0_5 = arith.constant 0 : index
    %c0_6 = arith.constant 0 : index
    %7 = vector.load %arg4[%c0_5, %c0_6] : memref<256x256xf32, #tpu.memory_space<vmem>>, vector<256x256xf32>
    %cst_7 = arith.constant dense<0.000000e+00> : vector<16x256xf32>
    %8 = tpu.matmul %6, %7, %cst_7 {dimension_numbers = #tpu.dot_dimension_numbers<[1], [0], [0], [1], [0, 0, 1, 1], [], []>} : vector<16x256xf32>, vector<256x256xf32>, vector<16x256xf32> -> vector<16x256xf32>
    %c0_8 = arith.constant 0 : index
    %c0_9 = arith.constant 0 : index
    %9 = vector.load %arg5[%c0_8, %c0_9] : memref<1x256xf32, #tpu.memory_space<vmem>>, vector<1x256xf32>
    %10 = vector.broadcast %9 : vector<1x256xf32> to vector<16x256xf32>
    %11 = arith.addf %8, %10 : vector<16x256xf32>
    %12 = math.tanh %11 : vector<16x256xf32>
    %c0_10 = arith.constant 0 : index
    %c0_11 = arith.constant 0 : index
    %13 = vector.load %arg6[%c0_10, %c0_11] : memref<256x128xf32, #tpu.memory_space<vmem>>, vector<256x128xf32>
    %cst_12 = arith.constant dense<0.000000e+00> : vector<16x128xf32>
    %14 = tpu.matmul %12, %13, %cst_12 {dimension_numbers = #tpu.dot_dimension_numbers<[1], [0], [0], [1], [0, 0, 1, 1], [], []>} : vector<16x256xf32>, vector<256x128xf32>, vector<16x128xf32> -> vector<16x128xf32>
    %c0_13 = arith.constant 0 : index
    %c0_14 = arith.constant 0 : index
    %15 = vector.load %arg7[%c0_13, %c0_14] : memref<1x128xf32, #tpu.memory_space<vmem>>, vector<1x128xf32>
    %16 = vector.broadcast %15 : vector<1x128xf32> to vector<16x128xf32>
    %17 = arith.addf %14, %16 : vector<16x128xf32>
    %18 = math.tanh %17 : vector<16x128xf32>
    %c0_15 = arith.constant 0 : index
    %c0_16 = arith.constant 0 : index
    %19 = vector.load %arg8[%c0_15, %c0_16] : memref<16x128xf32, #tpu.memory_space<vmem>>, vector<16x128xf32>
    tpu.vector_store %arg8[%c0_15, %c0_16], %18 {strides = array<i32>} : memref<16x128xf32, #tpu.memory_space<vmem>>, vector<16x128xf32>,
    return
  }
  func.func @transform_0(%arg0: i32) -> (i32, i32) {
    %c0_i32 = arith.constant 0 : i32
    %c0_i32_0 = arith.constant 0 : i32
    return %arg0, %c0_i32 : i32, i32
  }
  func.func @transform_1(%arg0: i32) -> (i32, i32) {
    %c0_i32 = arith.constant 0 : i32
    %c0_i32_0 = arith.constant 0 : i32
    %c0_i32_1 = arith.constant 0 : i32
    return %c0_i32, %c0_i32_0 : i32, i32
  }
  func.func @transform_2(%arg0: i32) -> (i32, i32) {
    %c0_i32 = arith.constant 0 : i32
    %c0_i32_0 = arith.constant 0 : i32
    %c0_i32_1 = arith.constant 0 : i32
    return %c0_i32, %c0_i32_0 : i32, i32
  }
  func.func @transform_3(%arg0: i32) -> (i32, i32) {
    %c0_i32 = arith.constant 0 : i32
    %c0_i32_0 = arith.constant 0 : i32
    %c0_i32_1 = arith.constant 0 : i32
    return %c0_i32, %c0_i32_0 : i32, i32
  }
  func.func @transform_4(%arg0: i32) -> (i32, i32) {
    %c0_i32 = arith.constant 0 : i32
    %c0_i32_0 = arith.constant 0 : i32
    %c0_i32_1 = arith.constant 0 : i32
    return %c0_i32, %c0_i32_0 : i32, i32
  }
  func.func @transform_5(%arg0: i32) -> (i32, i32) {
    %c0_i32 = arith.constant 0 : i32
    %c0_i32_0 = arith.constant 0 : i32
    %c0_i32_1 = arith.constant 0 : i32
    return %c0_i32, %c0_i32_0 : i32, i32
  }
  func.func @transform_6(%arg0: i32) -> (i32, i32) {
    %c0_i32 = arith.constant 0 : i32
    %c0_i32_0 = arith.constant 0 : i32
    %c0_i32_1 = arith.constant 0 : i32
    return %c0_i32, %c0_i32_0 : i32, i32
  }
  func.func @transform_7(%arg0: i32) -> (i32, i32) {
    %c0_i32 = arith.constant 0 : i32
    %c0_i32_0 = arith.constant 0 : i32
    return %arg0, %c0_i32 : i32, i32
  }
}

</mosaic_0001>

<llo_original>
// kernel: generator_net2_forward.1
$region0: #{generator_net2_forward.1}
  #allocation0 [shape = 'u32[]', space=smem, size = 0x4, offset = 0x4, fixed_abs, tag = 'smem constant byte address 0x4 - core index']
  #allocation1 [shape = 'u32[144,128]{1,0:T(1,128)}', space=vmem, size = 0x12000, scoped, tag = 'internal scratch']
  %s0 = inlined_call_operand.hbm [shape: f32[16,128], index: 0, kind: input, shape index: {}]
  %s1 = inlined_call_operand.hbm [shape: f32[128,256], index: 1, kind: input, shape index: {}]
  %s2 = inlined_call_operand.vmem [shape: f32[1,256], index: 2, kind: input, shape index: {}]
  %s3 = inlined_call_operand.hbm [shape: f32[256,256], index: 3, kind: input, shape index: {}]
  %s4 = inlined_call_operand.vmem [shape: f32[1,256], index: 4, kind: input, shape index: {}]
  %s5 = inlined_call_operand.hbm [shape: f32[256,128], index: 5, kind: input, shape index: {}]
  %s6 = inlined_call_operand.vmem [shape: f32[1,128], index: 6, kind: input, shape index: {}]
  %s7 = inlined_call_operand.hbm [shape: f32[16,128], index: 7, kind: output, shape index: {}]
  %s8 = sld [smem:[#allocation0]]
  $region54: #{generator_net2_forward.1} parent=0
    _
  %s10 = ssub.s32 1, %s8
  %s11 = scalar_select 0, %s10, %s8
  $region1: #{generator_net2_forward.1} parent=0
    #allocation2 [shape = 'u8[8192]{0}', space=vmem, size = 0x2000, scoped, tag = 'input window, operand 0, single buffered']
    #allocation3 [shape = 's32[1]{0}', space=sflag, size = 0x4, scoped, tag = 'scoped memory for generator_net2_forward.1']
    #allocation4 [shape = 's32[1]{0}', space=sflag, size = 0x4, scoped, tag = 'scoped memory for generator_net2_forward.1']
    #allocation5 [shape = 'u8[131072]{0}', space=vmem, size = 0x20000, scoped, tag = 'input window, operand 1, single buffered']
    #allocation6 [shape = 's32[1]{0}', space=sflag, size = 0x4, scoped, tag = 'scoped memory for generator_net2_forward.1']
    #allocation7 [shape = 'u8[262144]{0}', space=vmem, size = 0x40000, scoped, tag = 'input window, operand 3, single buffered']
    #allocation8 [shape = 'u8[131072]{0}', space=vmem, size = 0x20000, scoped, tag = 'input window, operand 5, single buffered']
    #allocation9 [shape = 's32[1]{0}', space=sflag, size = 0x4, scoped, tag = 'scoped memory for generator_net2_forward.1']
    #allocation10 [shape = 'u8[8192]{0}', space=vmem, size = 0x2000, scoped, tag = 'output window, operand 0, single buffered']
    %12 = vsyncpa [#allocation3], 0
    %13 = vsyncpa [#allocation6], 0
    %14 = vsyncpa [#allocation9], 0
    %15 = vsyncpa [#allocation4], 0
    // Predicated region
    $region2: #{generator_net2_forward.1} parent=1 // pred_check
      _
    $region3: #{generator_net2_forward.1} parent=1 // pred_check_branch
      %17 = sbr.rel (0) target = $region5
    $region4: #{generator_net2_forward.1} parent=1 // pred_region
      %s19 = ssub.s32 256, 256
      %20 = vsyncadd [#allocation3], %s19
      %s21 = sshll.u32 [#allocation2], 4
      %s22 = int_to_ptr.vmem [resolvable:$true] %s21
      %27 = dma.hbm_to_vmem [thread:$0]  %s0, 256, %s22, [#allocation3], 128, 128, 8
    $region5: #{generator_net2_forward.1} parent=1 // pred_fallthru
      _
    // Predicated region
    $region6: #{generator_net2_forward.1} parent=1 // pred_check
      _
    $region7: #{generator_net2_forward.1} parent=1 // pred_check_branch
      %29 = sbr.rel (0) target = $region9
    $region8: #{generator_net2_forward.1} parent=1 // pred_region
      %s31 = ssub.s32 4096, 4096
      %32 = vsyncadd [#allocation6], %s31
      %s33 = sshll.u32 [#allocation5], 4
      %s34 = int_to_ptr.vmem [resolvable:$true] %s33
      %39 = dma.hbm_to_vmem [thread:$0]  %s1, 4096, %s34, [#allocation6], 256, 256, 16
    $region9: #{generator_net2_forward.1} parent=1 // pred_fallthru
      _
    // Predicated region
    $region10: #{generator_net2_forward.1} parent=1 // pred_check
      _
    $region11: #{generator_net2_forward.1} parent=1 // pred_check_branch
      %41 = sbr.rel (0) target = $region13
    $region12: #{generator_net2_forward.1} parent=1 // pred_region
      _
    $region13: #{generator_net2_forward.1} parent=1 // pred_fallthru
      _
    // Predicated region
    $region14: #{generator_net2_forward.1} parent=1 // pred_check
      _
    $region15: #{generator_net2_forward.1} parent=1 // pred_check_branch
      %43 = sbr.rel (0) target = $region17
    $region16: #{generator_net2_forward.1} parent=1 // pred_region
      %s45 = ssub.s32 8192, 8192
      %46 = vsyncadd [#allocation6], %s45
      %s47 = sshll.u32 [#allocation7], 4
      %s48 = int_to_ptr.vmem [resolvable:$true] %s47
      %53 = dma.hbm_to_vmem [thread:$0]  %s3, 8192, %s48, [#allocation6], 256, 256, 16
    $region17: #{generator_net2_forward.1} parent=1 // pred_fallthru
      _
    // Predicated region
    $region18: #{generator_net2_forward.1} parent=1 // pred_check
      _
    $region19: #{generator_net2_forward.1} parent=1 // pred_check_branch
      %55 = sbr.rel (0) target = $region21
    $region20: #{generator_net2_forward.1} parent=1 // pred_region
      _
    $region21: #{generator_net2_forward.1} parent=1 // pred_fallthru
      _
    // Predicated region
    $region22: #{generator_net2_forward.1} parent=1 // pred_check
      _
    $region23: #{generator_net2_forward.1} parent=1 // pred_check_branch
      %57 = sbr.rel (0) target = $region25
    $region24: #{generator_net2_forward.1} parent=1 // pred_region
      %s59 = ssub.s32 4096, 4096
      %60 = vsyncadd [#allocation9], %s59
      %s61 = sshll.u32 [#allocation8], 4
      %s62 = int_to_ptr.vmem [resolvable:$true] %s61
      %67 = dma.hbm_to_vmem [thread:$0]  %s5, 4096, %s62, [#allocation9], 128, 128, 8
    $region25: #{generator_net2_forward.1} parent=1 // pred_fallthru
      _
    // Predicated region
    $region26: #{generator_net2_forward.1} parent=1 // pred_check
      _
    $region27: #{generator_net2_forward.1} parent=1 // pred_check_branch
      %69 = sbr.rel (0) target = $region29
    $region28: #{generator_net2_forward.1} parent=1 // pred_region
      _
    $region29: #{generator_net2_forward.1} parent=1 // pred_fallthru
      _
    // Predicated region
    $region30: #{generator_net2_forward.1} parent=1 // pred_check
      _
    $region31: #{generator_net2_forward.1} parent=1 // pred_check_branch
      %71 = sbr.rel (0) target = $region33
    $region32: #{generator_net2_forward.1} parent=1 // pred_region
      %72 = dma.done [#allocation3], 256
    $region33: #{generator_net2_forward.1} parent=1 // pred_fallthru
      _
    // Predicated region
    $region34: #{generator_net2_forward.1} parent=1 // pred_check
      _
    $region35: #{generator_net2_forward.1} parent=1 // pred_check_branch
      %74 = sbr.rel (0) target = $region37
    $region36: #{generator_net2_forward.1} parent=1 // pred_region
      %75 = dma.done [#allocation6], 4096
    $region37: #{generator_net2_forward.1} parent=1 // pred_fallthru
      _
    // Predicated region
    $region38: #{generator_net2_forward.1} parent=1 // pred_check
      _
    $region39: #{generator_net2_forward.1} parent=1 // pred_check_branch
      %77 = sbr.rel (0) target = $region41
    $region40: #{generator_net2_forward.1} parent=1 // pred_region
      %78 = dma.done [#allocation6], 8192
    $region41: #{generator_net2_forward.1} parent=1 // pred_fallthru
      _
    // Predicated region
    $region42: #{generator_net2_forward.1} parent=1 // pred_check
      _
    $region43: #{generator_net2_forward.1} parent=1 // pred_check_branch
      %80 = sbr.rel (0) target = $region45
    $region44: #{generator_net2_forward.1} parent=1 // pred_region
      %81 = dma.done [#allocation9], 4096
    $region45: #{generator_net2_forward.1} parent=1 // pred_fallthru
      _
    %v82 = vld [vmem:[#allocation2] sm:$0xff]
    %v83 = vld [vmem:[#allocation2 + $0x8] sm:$0xff]
    %v84 = vld [vmem:[#allocation5] sm:$0xff]
    %v85 = vld [vmem:[#allocation5 + $0x8] sm:$0xff]
    %v86 = vld [vmem:[#allocation5 + $0x10] sm:$0xff]
    %v87 = vld [vmem:[#allocation5 + $0x18] sm:$0xff]
    %v88 = vld [vmem:[#allocation5 + $0x20] sm:$0xff]
    %v89 = vld [vmem:[#allocation5 + $0x28] sm:$0xff]
    %v90 = vld [vmem:[#allocation5 + $0x30] sm:$0xff]
    %v91 = vld [vmem:[#allocation5 + $0x38] sm:$0xff]
    %v92 = vld [vmem:[#allocation5 + $0x40] sm:$0xff]
    %v93 = vld [vmem:[#allocation5 + $0x48] sm:$0xff]
    %v94 = vld [vmem:[#allocation5 + $0x50] sm:$0xff]
    %v95 = vld [vmem:[#allocation5 + $0x58] sm:$0xff]
    %v96 = vld [vmem:[#allocation5 + $0x60] sm:$0xff]
    %v97 = vld [vmem:[#allocation5 + $0x68] sm:$0xff]
    %v98 = vld [vmem:[#allocation5 + $0x70] sm:$0xff]
    %v99 = vld [vmem:[#allocation5 + $0x78] sm:$0xff]
    %v100 = vld [vmem:[#allocation5 + $0x80] sm:$0xff]
    %v101 = vld [vmem:[#allocation5 + $0x88] sm:$0xff]
    %v102 = vld [vmem:[#allocation5 + $0x90] sm:$0xff]
    %v103 = vld [vmem:[#allocation5 + $0x98] sm:$0xff]
    %v104 = vld [vmem:[#allocation5 + $0xa0] sm:$0xff]
    %v105 = vld [vmem:[#allocation5 + $0xa8] sm:$0xff]
    %v106 = vld [vmem:[#allocation5 + $0xb0] sm:$0xff]
    %v107 = vld [vmem:[#allocation5 + $0xb8] sm:$0xff]
    %v108 = vld [vmem:[#allocation5 + $0xc0] sm:$0xff]
    %v109 = vld [vmem:[#allocation5 + $0xc8] sm:$0xff]
    %v110 = vld [vmem:[#allocation5 + $0xd0] sm:$0xff]
    %v111 = vld [vmem:[#allocation5 + $0xd8] sm:$0xff]
    %v112 = vld [vmem:[#allocation5 + $0xe0] sm:$0xff]
    %v113 = vld [vmem:[#allocation5 + $0xe8] sm:$0xff]
    %v114 = vld [vmem:[#allocation5 + $0xf0] sm:$0xff]
    %v115 = vld [vmem:[#allocation5 + $0xf8] sm:$0xff]
    %v116 = vld [vmem:[%s2] sm:$0x3]
    %v118 = vlaneseq
    %v119 = vshrl.u32 %v118, 7
    %v120 = vsub.s32 0, %v119
    %v121 = vrot.slane %v116, %v120
    %v122 = vlaneseq
    %v123 = vshrl.u32 %v122, 7
    %v124 = vsub.s32 1, %v123
    %v125 = vrot.slane %v116, %v124
    %128 = vmatprep.subr.mxu0 %v115
    %129 = vmatpush1.msra.mxu0 %v114
    %130 = vmatprep.subr.mxu0 %v113
    %131 = vmatpush1.msra.mxu0 %v112
    %132 = vmatprep.subr.mxu0 %v111
    %133 = vmatpush1.msra.mxu0 %v110
    %134 = vmatprep.subr.mxu0 %v109
    %135 = vmatpush1.msra.mxu0 %v108
    %136 = vmatprep.subr.mxu0 %v107
    %137 = vmatpush1.msra.mxu0 %v106
    %138 = vmatprep.subr.mxu0 %v105
    %139 = vmatpush1.msra.mxu0 %v104
    %140 = vmatprep.subr.mxu0 %v103
    %141 = vmatpush1.msra.mxu0 %v102
    %142 = vmatprep.subr.mxu0 %v101
    %143 = vmatpush1.msra.mxu0 %v100
    %144 = vmatprep.subr.mxu0 %v99
    %145 = vmatpush1.msra.mxu0 %v98
    %146 = vmatprep.subr.mxu0 %v97
    %147 = vmatpush1.msra.mxu0 %v96
    %148 = vmatprep.subr.mxu0 %v95
    %149 = vmatpush1.msra.mxu0 %v94
    %150 = vmatprep.subr.mxu0 %v93
    %151 = vmatpush1.msra.mxu0 %v92
    %152 = vmatprep.subr.mxu0 %v91
    %153 = vmatpush1.msra.mxu0 %v90
    %154 = vmatprep.subr.mxu0 %v89
    %155 = vmatpush1.msra.mxu0 %v88
    %156 = vmatprep.subr.mxu0 %v87
    %157 = vmatpush1.msra.mxu0 %v86
    %158 = vmatprep.subr.mxu0 %v85
    %159 = vmatpush1.msra.mxu0 %v84
    %160 = vmatprep.subr.mxu0 0.0
    %161 = vmatpush2.msra.mxu0 0.0
    %162 = vmatprep.subr.mxu0 0.0
    %163 = vmatpush2.msra.mxu0 0.0
    %164 = vmatprep.subr.mxu0 0.0
    %165 = vmatpush2.msra.mxu0 0.0
    %166 = vmatprep.subr.mxu0 0.0
    %167 = vmatpush2.msra.mxu0 0.0
    %168 = vmatprep.subr.mxu0 0.0
    %169 = vmatpush2.msra.mxu0 0.0
    %170 = vmatprep.subr.mxu0 0.0
    %171 = vmatpush2.msra.mxu0 0.0
    %172 = vmatprep.subr.mxu0 0.0
    %173 = vmatpush2.msra.mxu0 0.0
    %174 = vmatprep.subr.mxu0 0.0
    %175 = vmatpush2.msra.mxu0 0.0
    %176 = vmatprep.subr.mxu0 0.0
    %177 = vmatpush2.msra.mxu0 0.0
    %178 = vmatprep.subr.mxu0 0.0
    %179 = vmatpush2.msra.mxu0 0.0
    %180 = vmatprep.subr.mxu0 0.0
    %181 = vmatpush2.msra.mxu0 0.0
    %182 = vmatprep.subr.mxu0 0.0
    %183 = vmatpush2.msra.mxu0 0.0
    %184 = vmatprep.subr.mxu0 0.0
    %185 = vmatpush2.msra.mxu0 0.0
    %186 = vmatprep.subr.mxu0 0.0
    %187 = vmatpush2.msra.mxu0 0.0
    %188 = vmatprep.subr.mxu0 0.0
    %189 = vmatpush2.msra.mxu0 0.0
    %190 = vmatprep.subr.mxu0 0.0
    %191 = vmatpush2.msra.mxu0 0.0
    %192 = vmatprep.mubr.f32.mxu0 0.0
    %193 = vmatmul.mubr.f32.gmra.mxu0 %v82
    %v194 = vpop.f32.mrf.mxu0
    %v195 = vadd.f32 %v121, %v194
    %v196 = vpop.f32.mrf.mxu0
    %v197 = vadd.f32 %v125, %v196
    %198 = vmatprep.mubr.f32.mxu0 0.0
    %199 = vmatmul.mubr.f32.gmra.mxu0 %v83
    %v200 = vpop.f32.mrf.mxu0
    %v201 = vadd.f32 %v121, %v200
    %v202 = vpop.f32.mrf.mxu0
    %v203 = vadd.f32 %v125, %v202
    %204 = vdwg.mxu0
    %v205 = vtanh.pop %v195
    %v206 = vtanh.pop %v197
    %v207 = vtanh.pop %v201
    %v208 = vtanh.pop %v203
    %v209 = vld [vmem:[#allocation7] sm:$0xff]
    %v210 = vld [vmem:[#allocation7 + $0x8] sm:$0xff]
    %v211 = vld [vmem:[#allocation7 + $0x10] sm:$0xff]
    %v212 = vld [vmem:[#allocation7 + $0x18] sm:$0xff]
    %v213 = vld [vmem:[#allocation7 + $0x20] sm:$0xff]
    %v214 = vld [vmem:[#allocation7 + $0x28] sm:$0xff]
    %v215 = vld [vmem:[#allocation7 + $0x30] sm:$0xff]
    %v216 = vld [vmem:[#allocation7 + $0x38] sm:$0xff]
    %v217 = vld [vmem:[#allocation7 + $0x40] sm:$0xff]
    %v218 = vld [vmem:[#allocation7 + $0x48] sm:$0xff]
    %v219 = vld [vmem:[#allocation7 + $0x50] sm:$0xff]
    %v220 = vld [vmem:[#allocation7 + $0x58] sm:$0xff]
    %v221 = vld [vmem:[#allocation7 + $0x60] sm:$0xff]
    %v222 = vld [vmem:[#allocation7 + $0x68] sm:$0xff]
    %v223 = vld [vmem:[#allocation7 + $0x70] sm:$0xff]
    %v224 = vld [vmem:[#allocation7 + $0x78] sm:$0xff]
    %v225 = vld [vmem:[#allocation7 + $0x80] sm:$0xff]
    %v226 = vld [vmem:[#allocation7 + $0x88] sm:$0xff]
    %v227 = vld [vmem:[#allocation7 + $0x90] sm:$0xff]
    %v228 = vld [vmem:[#allocation7 + $0x98] sm:$0xff]
    %v229 = vld [vmem:[#allocation7 + $0xa0] sm:$0xff]
    %v230 = vld [vmem:[#allocation7 + $0xa8] sm:$0xff]
    %v231 = vld [vmem:[#allocation7 + $0xb0] sm:$0xff]
    %v232 = vld [vmem:[#allocation7 + $0xb8] sm:$0xff]
    %v233 = vld [vmem:[#allocation7 + $0xc0] sm:$0xff]
    %v234 = vld [vmem:[#allocation7 + $0xc8] sm:$0xff]
    %v235 = vld [vmem:[#allocation7 + $0xd0] sm:$0xff]
    %v236 = vld [vmem:[#allocation7 + $0xd8] sm:$0xff]
    %v237 = vld [vmem:[#allocation7 + $0xe0] sm:$0xff]
    %v238 = vld [vmem:[#allocation7 + $0xe8] sm:$0xff]
    %v239 = vld [vmem:[#allocation7 + $0xf0] sm:$0xff]
    %v240 = vld [vmem:[#allocation7 + $0xf8] sm:$0xff]
    %v241 = vld [vmem:[#allocation7 + $0x100] sm:$0xff]
    %v242 = vld [vmem:[#allocation7 + $0x108] sm:$0xff]
    %v243 = vld [vmem:[#allocation7 + $0x110] sm:$0xff]
    %v244 = vld [vmem:[#allocation7 + $0x118] sm:$0xff]
    %v245 = vld [vmem:[#allocation7 + $0x120] sm:$0xff]
    %v246 = vld [vmem:[#allocation7 + $0x128] sm:$0xff]
    %v247 = vld [vmem:[#allocation7 + $0x130] sm:$0xff]
    %v248 = vld [vmem:[#allocation7 + $0x138] sm:$0xff]
    %v249 = vld [vmem:[#allocation7 + $0x140] sm:$0xff]
    %v250 = vld [vmem:[#allocation7 + $0x148] sm:$0xff]
    %v251 = vld [vmem:[#allocation7 + $0x150] sm:$0xff]
    %v252 = vld [vmem:[#allocation7 + $0x158] sm:$0xff]
    %v253 = vld [vmem:[#allocation7 + $0x160] sm:$0xff]
    %v254 = vld [vmem:[#allocation7 + $0x168] sm:$0xff]
    %v255 = vld [vmem:[#allocation7 + $0x170] sm:$0xff]
    %v256 = vld [vmem:[#allocation7 + $0x178] sm:$0xff]
    %v257 = vld [vmem:[#allocation7 + $0x180] sm:$0xff]
    %v258 = vld [vmem:[#allocation7 + $0x188] sm:$0xff]
    %v259 = vld [vmem:[#allocation7 + $0x190] sm:$0xff]
    %v260 = vld [vmem:[#allocation7 + $0x198] sm:$0xff]
    %v261 = vld [vmem:[#allocation7 + $0x1a0] sm:$0xff]
    %v262 = vld [vmem:[#allocation7 + $0x1a8] sm:$0xff]
    %v263 = vld [vmem:[#allocation7 + $0x1b0] sm:$0xff]
    %v264 = vld [vmem:[#allocation7 + $0x1b8] sm:$0xff]
    %v265 = vld [vmem:[#allocation7 + $0x1c0] sm:$0xff]
    %v266 = vld [vmem:[#allocation7 + $0x1c8] sm:$0xff]
    %v267 = vld [vmem:[#allocation7 + $0x1d0] sm:$0xff]
    %v268 = vld [vmem:[#allocation7 + $0x1d8] sm:$0xff]
    %v269 = vld [vmem:[#allocation7 + $0x1e0] sm:$0xff]
    %v270 = vld [vmem:[#allocation7 + $0x1e8] sm:$0xff]
    %v271 = vld [vmem:[#allocation7 + $0x1f0] sm:$0xff]
    %v272 = vld [vmem:[#allocation7 + $0x1f8] sm:$0xff]
    %v273 = vld [vmem:[%s4] sm:$0x3]
    %v275 = vlaneseq
    %v276 = vshrl.u32 %v275, 7
    %v277 = vsub.s32 0, %v276
    %v278 = vrot.slane %v273, %v277
    %v279 = vlaneseq
    %v280 = vshrl.u32 %v279, 7
    %v281 = vsub.s32 1, %v280
    %v282 = vrot.slane %v273, %v281
    %285 = vmatprep.subr.mxu0 %v240
    %286 = vmatpush1.msra.mxu0 %v239
    %287 = vmatprep.subr.mxu0 %v238
    %288 = vmatpush1.msra.mxu0 %v237
    %289 = vmatprep.subr.mxu0 %v236
    %290 = vmatpush1.msra.mxu0 %v235
    %291 = vmatprep.subr.mxu0 %v234
    %292 = vmatpush1.msra.mxu0 %v233
    %293 = vmatprep.subr.mxu0 %v232
    %294 = vmatpush1.msra.mxu0 %v231
    %295 = vmatprep.subr.mxu0 %v230
    %296 = vmatpush1.msra.mxu0 %v229
    %297 = vmatprep.subr.mxu0 %v228
    %298 = vmatpush1.msra.mxu0 %v227
    %299 = vmatprep.subr.mxu0 %v226
    %300 = vmatpush1.msra.mxu0 %v225
    %301 = vmatprep.subr.mxu0 %v224
    %302 = vmatpush1.msra.mxu0 %v223
    %303 = vmatprep.subr.mxu0 %v222
    %304 = vmatpush1.msra.mxu0 %v221
    %305 = vmatprep.subr.mxu0 %v220
    %306 = vmatpush1.msra.mxu0 %v219
    %307 = vmatprep.subr.mxu0 %v218
    %308 = vmatpush1.msra.mxu0 %v217
    %309 = vmatprep.subr.mxu0 %v216
    %310 = vmatpush1.msra.mxu0 %v215
    %311 = vmatprep.subr.mxu0 %v214
    %312 = vmatpush1.msra.mxu0 %v213
    %313 = vmatprep.subr.mxu0 %v212
    %314 = vmatpush1.msra.mxu0 %v211
    %315 = vmatprep.subr.mxu0 %v210
    %316 = vmatpush1.msra.mxu0 %v209
    %317 = vmatprep.subr.mxu0 %v272
    %318 = vmatpush2.msra.mxu0 %v271
    %319 = vmatprep.subr.mxu0 %v270
    %320 = vmatpush2.msra.mxu0 %v269
    %321 = vmatprep.subr.mxu0 %v268
    %322 = vmatpush2.msra.mxu0 %v267
    %323 = vmatprep.subr.mxu0 %v266
    %324 = vmatpush2.msra.mxu0 %v265
    %325 = vmatprep.subr.mxu0 %v264
    %326 = vmatpush2.msra.mxu0 %v263
    %327 = vmatprep.subr.mxu0 %v262
    %328 = vmatpush2.msra.mxu0 %v261
    %329 = vmatprep.subr.mxu0 %v260
    %330 = vmatpush2.msra.mxu0 %v259
    %331 = vmatprep.subr.mxu0 %v258
    %332 = vmatpush2.msra.mxu0 %v257
    %333 = vmatprep.subr.mxu0 %v256
    %334 = vmatpush2.msra.mxu0 %v255
    %335 = vmatprep.subr.mxu0 %v254
    %336 = vmatpush2.msra.mxu0 %v253
    %337 = vmatprep.subr.mxu0 %v252
    %338 = vmatpush2.msra.mxu0 %v251
    %339 = vmatprep.subr.mxu0 %v250
    %340 = vmatpush2.msra.mxu0 %v249
    %341 = vmatprep.subr.mxu0 %v248
    %342 = vmatpush2.msra.mxu0 %v247
    %343 = vmatprep.subr.mxu0 %v246
    %344 = vmatpush2.msra.mxu0 %v245
    %345 = vmatprep.subr.mxu0 %v244
    %346 = vmatpush2.msra.mxu0 %v243
    %347 = vmatprep.subr.mxu0 %v242
    %348 = vmatpush2.msra.mxu0 %v241
    %349 = vmatprep.mubr.f32.mxu0 %v206
    %350 = vmatmul.mubr.f32.gmra.mxu0 %v205
    %v351 = vpop.f32.mrf.mxu0
    %v352 = vadd.f32 %v278, %v351
    %v353 = vpop.f32.mrf.mxu0
    %v354 = vadd.f32 %v282, %v353
    %355 = vmatprep.mubr.f32.mxu0 %v208
    %356 = vmatmul.mubr.f32.gmra.mxu0 %v207
    %v357 = vpop.f32.mrf.mxu0
    %v358 = vadd.f32 %v278, %v357
    %v359 = vpop.f32.mrf.mxu0
    %v360 = vadd.f32 %v282, %v359
    %361 = vdwg.mxu0
    %v362 = vtanh.pop %v352
    %v363 = vtanh.pop %v354
    %v364 = vtanh.pop %v358
    %v365 = vtanh.pop %v360
    %v366 = vld [vmem:[#allocation8] sm:$0xff]
    %v367 = vld [vmem:[#allocation8 + $0x8] sm:$0xff]
    %v368 = vld [vmem:[#allocation8 + $0x10] sm:$0xff]
    %v369 = vld [vmem:[#allocation8 + $0x18] sm:$0xff]
    %v370 = vld [vmem:[#allocation8 + $0x20] sm:$0xff]
    %v371 = vld [vmem:[#allocation8 + $0x28] sm:$0xff]
    %v372 = vld [vmem:[#allocation8 + $0x30] sm:$0xff]
    %v373 = vld [vmem:[#allocation8 + $0x38] sm:$0xff]
    %v374 = vld [vmem:[#allocation8 + $0x40] sm:$0xff]
    %v375 = vld [vmem:[#allocation8 + $0x48] sm:$0xff]
    %v376 = vld [vmem:[#allocation8 + $0x50] sm:$0xff]
    %v377 = vld [vmem:[#allocation8 + $0x58] sm:$0xff]
    %v378 = vld [vmem:[#allocation8 + $0x60] sm:$0xff]
    %v379 = vld [vmem:[#allocation8 + $0x68] sm:$0xff]
    %v380 = vld [vmem:[#allocation8 + $0x70] sm:$0xff]
    %v381 = vld [vmem:[#allocation8 + $0x78] sm:$0xff]
    %v382 = vld [vmem:[#allocation8 + $0x80] sm:$0xff]
    %v383 = vld [vmem:[#allocation8 + $0x88] sm:$0xff]
    %v384 = vld [vmem:[#allocation8 + $0x90] sm:$0xff]
    %v385 = vld [vmem:[#allocation8 + $0x98] sm:$0xff]
    %v386 = vld [vmem:[#allocation8 + $0xa0] sm:$0xff]
    %v387 = vld [vmem:[#allocation8 + $0xa8] sm:$0xff]
    %v388 = vld [vmem:[#allocation8 + $0xb0] sm:$0xff]
    %v389 = vld [vmem:[#allocation8 + $0xb8] sm:$0xff]
    %v390 = vld [vmem:[#allocation8 + $0xc0] sm:$0xff]
    %v391 = vld [vmem:[#allocation8 + $0xc8] sm:$0xff]
    %v392 = vld [vmem:[#allocation8 + $0xd0] sm:$0xff]
    %v393 = vld [vmem:[#allocation8 + $0xd8] sm:$0xff]
    %v394 = vld [vmem:[#allocation8 + $0xe0] sm:$0xff]
    %v395 = vld [vmem:[#allocation8 + $0xe8] sm:$0xff]
    %v396 = vld [vmem:[#allocation8 + $0xf0] sm:$0xff]
    %v397 = vld [vmem:[#allocation8 + $0xf8] sm:$0xff]
    %v398 = vld [vmem:[%s6] sm:$0x1]
    %v400 = vlaneseq
    %v401 = vshrl.u32 %v400, 7
    %v402 = vsub.s32 0, %v401
    %v403 = vrot.slane %v398, %v402
    %405 = vmatprep.subr.mxu0 0.0
    %406 = vmatpush1.msra.mxu0 %v381
    %407 = vmatprep.subr.mxu0 0.0
    %408 = vmatpush1.msra.mxu0 %v380
    %409 = vmatprep.subr.mxu0 0.0
    %410 = vmatpush1.msra.mxu0 %v379
    %411 = vmatprep.subr.mxu0 0.0
    %412 = vmatpush1.msra.mxu0 %v378
    %413 = vmatprep.subr.mxu0 0.0
    %414 = vmatpush1.msra.mxu0 %v377
    %415 = vmatprep.subr.mxu0 0.0
    %416 = vmatpush1.msra.mxu0 %v376
    %417 = vmatprep.subr.mxu0 0.0
    %418 = vmatpush1.msra.mxu0 %v375
    %419 = vmatprep.subr.mxu0 0.0
    %420 = vmatpush1.msra.mxu0 %v374
    %421 = vmatprep.subr.mxu0 0.0
    %422 = vmatpush1.msra.mxu0 %v373
    %423 = vmatprep.subr.mxu0 0.0
    %424 = vmatpush1.msra.mxu0 %v372
    %425 = vmatprep.subr.mxu0 0.0
    %426 = vmatpush1.msra.mxu0 %v371
    %427 = vmatprep.subr.mxu0 0.0
    %428 = vmatpush1.msra.mxu0 %v370
    %429 = vmatprep.subr.mxu0 0.0
    %430 = vmatpush1.msra.mxu0 %v369
    %431 = vmatprep.subr.mxu0 0.0
    %432 = vmatpush1.msra.mxu0 %v368
    %433 = vmatprep.subr.mxu0 0.0
    %434 = vmatpush1.msra.mxu0 %v367
    %435 = vmatprep.subr.mxu0 0.0
    %436 = vmatpush1.msra.mxu0 %v366
    %437 = vmatprep.subr.mxu0 0.0
    %438 = vmatpush2.msra.mxu0 %v397
    %439 = vmatprep.subr.mxu0 0.0
    %440 = vmatpush2.msra.mxu0 %v396
    %441 = vmatprep.subr.mxu0 0.0
    %442 = vmatpush2.msra.mxu0 %v395
    %443 = vmatprep.subr.mxu0 0.0
    %444 = vmatpush2.msra.mxu0 %v394
    %445 = vmatprep.subr.mxu0 0.0
    %446 = vmatpush2.msra.mxu0 %v393
    %447 = vmatprep.subr.mxu0 0.0
    %448 = vmatpush2.msra.mxu0 %v392
    %449 = vmatprep.subr.mxu0 0.0
    %450 = vmatpush2.msra.mxu0 %v391
    %451 = vmatprep.subr.mxu0 0.0
    %452 = vmatpush2.msra.mxu0 %v390
    %453 = vmatprep.subr.mxu0 0.0
    %454 = vmatpush2.msra.mxu0 %v389
    %455 = vmatprep.subr.mxu0 0.0
    %456 = vmatpush2.msra.mxu0 %v388
    %457 = vmatprep.subr.mxu0 0.0
    %458 = vmatpush2.msra.mxu0 %v387
    %459 = vmatprep.subr.mxu0 0.0
    %460 = vmatpush2.msra.mxu0 %v386
    %461 = vmatprep.subr.mxu0 0.0
    %462 = vmatpush2.msra.mxu0 %v385
    %463 = vmatprep.subr.mxu0 0.0
    %464 = vmatpush2.msra.mxu0 %v384
    %465 = vmatprep.subr.mxu0 0.0
    %466 = vmatpush2.msra.mxu0 %v383
    %467 = vmatprep.subr.mxu0 0.0
    %468 = vmatpush2.msra.mxu0 %v382
    %469 = vmatprep.mubr.f32.mxu0 %v363
    %470 = vmatmul.mubr.f32.gmra.mxu0 %v362
    %v471 = vpop.f32.mrf.mxu0
    %v472 = vadd.f32 %v403, %v471
    %v473 = vpop.f32.mrf.mxu0
    %474 = vmatprep.mubr.f32.mxu0 %v365
    %475 = vmatmul.mubr.f32.gmra.mxu0 %v364
    %v476 = vpop.f32.mrf.mxu0
    %v477 = vadd.f32 %v403, %v476
    %v478 = vpop.f32.mrf.mxu0
    %479 = vdwg.mxu0
    %v480 = vtanh.pop %v472
    %v481 = vtanh.pop %v477
    %482 = vst [vmem:[#allocation10] sm:$0xff] %v480
    %483 = vst [vmem:[#allocation10 + $0x8] sm:$0xff] %v481
    // Predicated region
    $region46: #{generator_net2_forward.1} parent=1 // pred_check
      _
    $region47: #{generator_net2_forward.1} parent=1 // pred_check_branch
      %485 = sbr.rel (0) target = $region49
    $region48: #{generator_net2_forward.1} parent=1 // pred_region
      %s487 = ssub.s32 256, 256
      %488 = vsyncadd [#allocation4], %s487
      %s489 = sshll.u32 [#allocation10], 4
      %s490 = int_to_ptr.vmem [resolvable:$true] %s489
      %495 = dma.vmem_to_hbm [thread:$0]  %s490, 256, %s7, [#allocation4], 128, 128, 8
    $region49: #{generator_net2_forward.1} parent=1 // pred_fallthru
      _
    // Predicated region
    $region50: #{generator_net2_forward.1} parent=1 // pred_check
      _
    $region51: #{generator_net2_forward.1} parent=1 // pred_check_branch
      %497 = sbr.rel (0) target = $region53
    $region52: #{generator_net2_forward.1} parent=1 // pred_region
      %498 = dma.done [#allocation4], 256
    $region53: #{generator_net2_forward.1} parent=1 // pred_fallthru
      _
    %499 = vsyncpa [#allocation3], 1
    %500 = vsyncpa [#allocation6], 1
    %501 = vsyncpa [#allocation9], 1
    %502 = vsyncpa [#allocation4], 1

</llo_original>
